<compile_context>
chip_gen: v6e
topology: v6e:2x2x1
jax: 0.10.0
libtpu: 0.0.40
codegen_flags: <defaults>
</compile_context>

<pallas_src>
import functools

import jax
import jax.numpy as jnp
from jax import lax
from jax.experimental import pallas as pl
from jax.experimental.pallas import tpu as pltpu


def _conv_bn_silu_kernel(x_ref, w_ref, mask_ref, shift_ref, o_ref, col_ref,
                         *, H, W, K, approx_silu, precision):
    """One (batch-element, C2-block) tile per grid step.

    x_ref:     (1, C1, H*W)        input image, spatial flattened into lanes
    w_ref:     (c2_blk, K*K*C1)    BN-scale-folded weights, reduction idx = t*C1 + ci
    mask_ref:  (K*K, H*W)          0/1 tap-validity planes (implicit zero padding)
    shift_ref: (c2_blk, 1)         folded BN shift = beta - mean * gamma / sqrt(var+eps)
    o_ref:     (1, c2_blk, H*W)    output tile (lane-dense: H*W multiple of 128 or full)
    col_ref:   (K*K*C1, H*W)       VMEM im2col scratch
    """
    HW = H * W
    p = K // 2
    C1 = x_ref.shape[1]
    x = x_ref[0]                                          # (C1, HW)

    # --- im2col staging: roll (XLU) + mask (VPU) each tap into the column matrix ---
    for kh in range(K):
        for kw in range(K):
            t = kh * K + kw
            off = (kh - p) * W + (kw - p)                 # flattened spatial offset
            tap = x if off == 0 else pltpu.roll(x, shift=(-off) % HW, axis=1)
            if off != 0:
                # zero out wrapped / out-of-image lanes (implicit padding)
                tap = tap * mask_ref[pl.ds(t, 1), :]
            col_ref[pl.ds(t * C1, C1), :] = tap

    # --- single MXU contraction of depth K*K*C1, f32 accumulation ---
    acc = jnp.dot(w_ref[...], col_ref[...],
                  preferred_element_type=jnp.float32, precision=precision)

    # --- fused BN shift + SiLU epilogue (all f32, lane-dense) ---
    y = acc + shift_ref[...]
    if approx_silu:
        # exp and reciprocal both go to the (otherwise idle) EUP slot.
        y = y * pl.reciprocal(1.0 + jnp.exp(-y), approx=True)
    else:
        y = y * jax.nn.sigmoid(y)
    o_ref[0] = y.astype(o_ref.dtype)                      # plain unmasked lane-dense vst


def _prefer_128_c2_block():
    # v5e's MXU is 4x128x128: 256-wide output blocks gain nothing there but double the
    # accumulator / output footprint against its 16 MiB default scoped-VMEM budget.
    try:
        return "v5" in jax.devices()[0].device_kind.lower()
    except Exception:
        return False


def _pick_c2_block(c2, prefer_128):
    cands = (128, 256) if prefer_128 else (256, 128)
    for cand in cands:
        if c2 % cand == 0:
            return cand, c2
    blk = cands[0]
    if c2 > blk:
        c2_pad = -(-c2 // blk) * blk                      # pad to uniform MXU-wide blocks
        return blk, c2_pad
    c2_pad = -(-c2 // 8) * 8                              # small C2: one sublane-aligned block
    return c2_pad, c2_pad


def conv_forward(x_nchw, weight_oihw, gamma, beta, running_mean, running_var,
                 *, k=3, eps=1e-3, compute_dtype=jnp.bfloat16, approx_silu=True,
                 precision=None):
    """Conv.forward(x): SiLU(BN(Conv2d(x))), stride=1, groups=1, dilation=1,
    pad=k//2, no conv bias, BatchNorm2d in eval mode (running stats, eps=1e-3)."""
    N, C1, H, W = x_nchw.shape
    C2 = weight_oihw.shape[0]
    assert weight_oihw.shape == (C2, C1, k, k), "groups/dilation != 1 not supported"
    HW = H * W
    KK = k * k
    p = k // 2

    # ---- fold BatchNorm (eval) into the conv: w' = w * scale, epilogue = "+ shift" ----
    inv_std = lax.rsqrt(running_var.astype(jnp.float32) + eps)
    scale = gamma.astype(jnp.float32) * inv_std                                # (C2,)
    shift = beta.astype(jnp.float32) - running_mean.astype(jnp.float32) * scale

    w = weight_oihw.astype(jnp.float32) * scale[:, None, None, None]
    # (C2, C1, K, K) -> (C2, K, K, C1) -> (C2, K*K*C1); reduction index = t*C1 + ci,
    # matching the im2col scratch layout.  Lane-dense (last dim K*K*C1, not C1).
    w_im2col = jnp.transpose(w, (0, 2, 3, 1)).reshape(C2, KK * C1)

    # ---- C2 blocking (MXU-width per generation, padded to uniform blocks) ----
    c2_blk, C2_pad = _pick_c2_block(C2, _prefer_128_c2_block())
    if C2_pad != C2:
        w_im2col = jnp.pad(w_im2col, ((0, C2_pad - C2), (0, 0)))
        shift = jnp.pad(shift, (0, C2_pad - C2))
    n_c2 = C2_pad // c2_blk
    shift = shift.reshape(C2_pad, 1)                       # broadcasts over lanes (pixels)

    # ---- MXU operand dtype (bf16 production / f32 strict) ----
    x_flat = x_nchw.reshape(N, C1, HW).astype(compute_dtype)   # free reshape, no pad pass
    w_im2col = w_im2col.astype(compute_dtype)
    # TODO(synk): on v7x an fp8 weight/activation path (~2x bf16) is possible; v5e/v6e
    # MXUs take int8/int4 instead, so that is a generation-specific branch not taken here.

    # ---- precomputed tap-validity masks (implicit zero padding), hoisted out of kernel ----
    row = jnp.arange(HW, dtype=jnp.int32) // W
    col = jnp.arange(HW, dtype=jnp.int32) % W
    masks = []
    for kh in range(k):
        for kw in range(k):
            dh, dw = kh - p, kw - p
            valid = jnp.ones((HW,), jnp.bool_)
            if dh > 0:
                valid = valid & (row < H - dh)
            elif dh < 0:
                valid = valid & (row >= -dh)
            if dw > 0:
                valid = valid & (col < W - dw)
            elif dw < 0:
                valid = valid & (col >= -dw)
            masks.append(valid)
    tap_mask = jnp.stack(masks).astype(compute_dtype)      # (K*K, HW), DMA'd once

    # ---- explicit VMEM budget (double-buffered ins/outs + im2col scratch + acc) ----
    bpe = jnp.dtype(compute_dtype).itemsize
    x_bytes = C1 * HW * bpe
    w_bytes = c2_blk * KK * C1 * bpe
    mask_bytes = KK * HW * bpe
    shift_bytes = c2_blk * 128 * 4                         # (c2_blk, 1) pads lanes to 128
    out_bytes = c2_blk * HW * 4
    col_bytes = KK * C1 * HW * bpe
    acc_bytes = c2_blk * HW * 4
    per_step = (2 * (x_bytes + w_bytes + mask_bytes + shift_bytes + out_bytes)
                + col_bytes + 3 * acc_bytes)
    vmem_limit = int(min(max(1.5 * per_step, 32 * 1024 * 1024), 64 * 1024 * 1024))

    kernel = functools.partial(_conv_bn_silu_kernel, H=H, W=W, K=k,
                               approx_silu=approx_silu, precision=precision)

    cost = pl.CostEstimate(
        flops=2 * N * HW * KK * C1 * C2_pad,
        transcendentals=(2 if approx_silu else 1) * N * HW * C2_pad,
        bytes_accessed=int(N * C1 * HW * bpe                       # x (read once per batch)
                           + N * n_c2 * c2_blk * KK * C1 * bpe     # weights per step
                           + KK * HW * bpe + C2_pad * 4            # masks + shift
                           + N * C2_pad * HW * 4),                 # output
    )

    out_flat = pl.pallas_call(
        kernel,
        out_shape=jax.ShapeDtypeStruct((N, C2_pad, HW), jnp.float32),
        grid_spec=pltpu.PrefetchScalarGridSpec(
            num_scalar_prefetch=0,
            # Batch outer, C2-blocks inner: x's block index depends only on the outer
            # axis, so activations are NOT re-DMA'd across the inner C2 sweep.
            grid=(N, n_c2),
            in_specs=[
                pl.BlockSpec((1, C1, HW), lambda n, j: (n, 0, 0)),
                pl.BlockSpec((c2_blk, KK * C1), lambda n, j: (j, 0)),
                pl.BlockSpec((KK, HW), lambda n, j: (0, 0)),
                pl.BlockSpec((c2_blk, 1), lambda n, j: (j, 0)),
            ],
            out_specs=pl.BlockSpec((1, c2_blk, HW), lambda n, j: (n, j, 0)),
            scratch_shapes=[pltpu.VMEM((KK * C1, HW), compute_dtype)],
        ),
        compiler_params=pltpu.CompilerParams(
            dimension_semantics=("parallel", "parallel"),
            vmem_limit_bytes=vmem_limit),
        cost_estimate=cost,
    )(x_flat, w_im2col, tap_mask, shift)

    return out_flat[:, :C2, :].reshape(N, C2, H, W)


def _reference(x_nchw, weight_oihw, gamma, beta, running_mean, running_var,
               *, k=3, eps=1e-3, precision=None):
    p = k // 2
    y = lax.conv_general_dilated(
        x_nchw.astype(jnp.float32), weight_oihw.astype(jnp.float32),
        window_strides=(1, 1), padding=((p, p), (p, p)),
        dimension_numbers=("NCHW", "OIHW", "NCHW"), precision=precision)
    inv_std = 1.0 / jnp.sqrt(running_var + eps)
    y = (y - running_mean[None, :, None, None]) * (gamma * inv_std)[None, :, None, None] \
        + beta[None, :, None, None]
    return y * jax.nn.sigmoid(y)


if __name__ == "__main__":
    # Module config: Conv(c1=4, c2=8, k=3, s=1) -> pad=1, groups=1, dilation=1, no bias,
    # BatchNorm2d(eps=0.001) in eval mode, SiLU activation.
    N, C1, H, W = 2, 4, 16, 16
    C2, K = 8, 3

    key = jax.random.PRNGKey(0)
    kx, kw, kg, kb, km, kv = jax.random.split(key, 6)

    x = jax.random.normal(kx, (N, C1, H, W), jnp.float32)
    weight = 0.1 * jax.random.normal(kw, (C2, C1, K, K), jnp.float32)   # Conv2d.weight (OIHW)
    gamma = 1.0 + 0.1 * jax.random.normal(kg, (C2,), jnp.float32)       # bn.weight
    beta = 0.1 * jax.random.normal(kb, (C2,), jnp.float32)              # bn.bias
    running_mean = 0.1 * jax.random.normal(km, (C2,), jnp.float32)      # bn.running_mean
    running_var = 1.0 + 0.5 * jnp.abs(jax.random.normal(kv, (C2,), jnp.float32))  # bn.running_var

    # Strict-parity path: f32 operands, precision=HIGHEST, exact sigmoid.
    ref_hi = _reference(x, weight, gamma, beta, running_mean, running_var,
                        k=K, eps=1e-3, precision=lax.Precision.HIGHEST)
    out_f32 = conv_forward(x, weight, gamma, beta, running_mean, running_var,
                           k=K, eps=1e-3, compute_dtype=jnp.float32,
                           approx_silu=False, precision=lax.Precision.HIGHEST)
    out_f32 = jax.block_until_ready(out_f32)
    assert out_f32.shape == (N, C2, H, W)
    assert jnp.allclose(out_f32, ref_hi, rtol=1e-4, atol=1e-4), "f32 mismatch vs reference"

    # Production path: bf16 MXU operands (f32 accumulation) + EUP-approx SiLU.
    ref = _reference(x, weight, gamma, beta, running_mean, running_var, k=K, eps=1e-3)
    out_bf16 = conv_forward(x, weight, gamma, beta, running_mean, running_var,
                            k=K, eps=1e-3, compute_dtype=jnp.bfloat16,
                            approx_silu=True, precision=None)
    out_bf16 = jax.block_until_ready(out_bf16)
    assert out_bf16.shape == (N, C2, H, W)
    assert jnp.allclose(out_bf16, ref, rtol=5e-2, atol=5e-2), "bf16 mismatch vs reference"

    print("KERNEL_OK")
</pallas_src>

<mosaic_0001>
module attributes {stable_mosaic.version = 11 : i64} {
  func.func @_conv_bn_silu_kernel(%arg0: i32, %arg1: i32, %arg2: memref<1x4x256xf32, #tpu.memory_space<vmem>>, %arg3: memref<8x36xf32, #tpu.memory_space<vmem>>, %arg4: memref<9x256xf32, #tpu.memory_space<vmem>>, %arg5: memref<8x1xf32, #tpu.memory_space<vmem>>, %arg6: memref<1x8x256xf32, #tpu.memory_space<vmem>>, %arg7: memref<36x256xf32, #tpu.memory_space<vmem>>) attributes {dimension_semantics = [#tpu.dimension_semantics<parallel>, #tpu.dimension_semantics<parallel>], iteration_bounds = array<i64: 2, 1>, scalar_prefetch = 0 : i64, scratch_operands = 1 : i64, tpu.core_type = #tpu.core_type<tc>, window_params = [{transform_indices = @transform_0, window_bounds = array<i64: 1, 4, 256>}, {transform_indices = @transform_1, window_bounds = array<i64: 8, 36>}, {pipeline_mode = #tpu.pipeline_mode<synchronous>, transform_indices = @transform_2, window_bounds = array<i64: 9, 256>}, {transform_indices = @transform_3, window_bounds = array<i64: 8, 1>}, {transform_indices = @transform_4, window_bounds = array<i64: 1, 8, 256>}]} {
    %c0 = arith.constant 0 : index
    %c0_0 = arith.constant 0 : index
    %c0_1 = arith.constant 0 : index
    %0 = vector.load %arg2[%c0, %c0_0, %c0_1] : memref<1x4x256xf32, #tpu.memory_space<vmem>>, vector<1x4x256xf32>
    %1 = vector.shape_cast %0 : vector<1x4x256xf32> to vector<4x256xf32>
    %c17_i32 = arith.constant 17 : i32
    %2 = tpu.dynamic_rotate %1 by %c17_i32 dim 1 : vector<4x256xf32>, i32 -> vector<4x256xf32>
    %c0_2 = arith.constant 0 : index
    %c0_3 = arith.constant 0 : index
    %3 = vector.load %arg4[%c0_2, %c0_3] : memref<9x256xf32, #tpu.memory_space<vmem>>, vector<1x256xf32>
    %4 = vector.broadcast %3 : vector<1x256xf32> to vector<4x256xf32>
    %5 = arith.mulf %2, %4 : vector<4x256xf32>
    %c0_4 = arith.constant 0 : index
    %c0_5 = arith.constant 0 : index
    %6 = vector.load %arg7[%c0_4, %c0_5] : memref<36x256xf32, #tpu.memory_space<vmem>>, vector<4x256xf32>
    tpu.vector_store %arg7[%c0_4, %c0_5], %5 {strides = array<i32>} : memref<36x256xf32, #tpu.memory_space<vmem>>, vector<4x256xf32>,
    %c16_i32 = arith.constant 16 : i32
    %7 = tpu.dynamic_rotate %1 by %c16_i32 dim 1 : vector<4x256xf32>, i32 -> vector<4x256xf32>
    %c1 = arith.constant 1 : index
    %c0_6 = arith.constant 0 : index
    %8 = vector.load %arg4[%c1, %c0_6] : memref<9x256xf32, #tpu.memory_space<vmem>>, vector<1x256xf32>
    %9 = vector.broadcast %8 : vector<1x256xf32> to vector<4x256xf32>
    %10 = arith.mulf %7, %9 : vector<4x256xf32>
    %c4 = arith.constant 4 : index
    %c0_7 = arith.constant 0 : index
    %11 = vector.load %arg7[%c4, %c0_7] : memref<36x256xf32, #tpu.memory_space<vmem>>, vector<4x256xf32>
    tpu.vector_store %arg7[%c4, %c0_7], %10 {strides = array<i32>} : memref<36x256xf32, #tpu.memory_space<vmem>>, vector<4x256xf32>,
    %c15_i32 = arith.constant 15 : i32
    %12 = tpu.dynamic_rotate %1 by %c15_i32 dim 1 : vector<4x256xf32>, i32 -> vector<4x256xf32>
    %c2 = arith.constant 2 : index
    %c0_8 = arith.constant 0 : index
    %13 = vector.load %arg4[%c2, %c0_8] : memref<9x256xf32, #tpu.memory_space<vmem>>, vector<1x256xf32>
    %14 = vector.broadcast %13 : vector<1x256xf32> to vector<4x256xf32>
    %15 = arith.mulf %12, %14 : vector<4x256xf32>
    %c8 = arith.constant 8 : index
    %c0_9 = arith.constant 0 : index
    %16 = vector.load %arg7[%c8, %c0_9] : memref<36x256xf32, #tpu.memory_space<vmem>>, vector<4x256xf32>
    tpu.vector_store %arg7[%c8, %c0_9], %15 {strides = array<i32>} : memref<36x256xf32, #tpu.memory_space<vmem>>, vector<4x256xf32>,
    %c1_i32 = arith.constant 1 : i32
    %17 = tpu.dynamic_rotate %1 by %c1_i32 dim 1 : vector<4x256xf32>, i32 -> vector<4x256xf32>
    %c3 = arith.constant 3 : index
    %c0_10 = arith.constant 0 : index
    %18 = vector.load %arg4[%c3, %c0_10] : memref<9x256xf32, #tpu.memory_space<vmem>>, vector<1x256xf32>
    %19 = vector.broadcast %18 : vector<1x256xf32> to vector<4x256xf32>
    %20 = arith.mulf %17, %19 : vector<4x256xf32>
    %c12 = arith.constant 12 : index
    %c0_11 = arith.constant 0 : index
    %21 = vector.load %arg7[%c12, %c0_11] : memref<36x256xf32, #tpu.memory_space<vmem>>, vector<4x256xf32>
    tpu.vector_store %arg7[%c12, %c0_11], %20 {strides = array<i32>} : memref<36x256xf32, #tpu.memory_space<vmem>>, vector<4x256xf32>,
    %c16 = arith.constant 16 : index
    %c0_12 = arith.constant 0 : index
    %22 = vector.load %arg7[%c16, %c0_12] : memref<36x256xf32, #tpu.memory_space<vmem>>, vector<4x256xf32>
    tpu.vector_store %arg7[%c16, %c0_12], %1 {strides = array<i32>} : memref<36x256xf32, #tpu.memory_space<vmem>>, vector<4x256xf32>,
    %c255_i32 = arith.constant 255 : i32
    %23 = tpu.dynamic_rotate %1 by %c255_i32 dim 1 : vector<4x256xf32>, i32 -> vector<4x256xf32>
    %c5 = arith.constant 5 : index
    %c0_13 = arith.constant 0 : index
    %24 = vector.load %arg4[%c5, %c0_13] : memref<9x256xf32, #tpu.memory_space<vmem>>, vector<1x256xf32>
    %25 = vector.broadcast %24 : vector<1x256xf32> to vector<4x256xf32>
    %26 = arith.mulf %23, %25 : vector<4x256xf32>
    %c20 = arith.constant 20 : index
    %c0_14 = arith.constant 0 : index
    %27 = vector.load %arg7[%c20, %c0_14] : memref<36x256xf32, #tpu.memory_space<vmem>>, vector<4x256xf32>
    tpu.vector_store %arg7[%c20, %c0_14], %26 {strides = array<i32>} : memref<36x256xf32, #tpu.memory_space<vmem>>, vector<4x256xf32>,
    %c241_i32 = arith.constant 241 : i32
    %28 = tpu.dynamic_rotate %1 by %c241_i32 dim 1 : vector<4x256xf32>, i32 -> vector<4x256xf32>
    %c6 = arith.constant 6 : index
    %c0_15 = arith.constant 0 : index
    %29 = vector.load %arg4[%c6, %c0_15] : memref<9x256xf32, #tpu.memory_space<vmem>>, vector<1x256xf32>
    %30 = vector.broadcast %29 : vector<1x256xf32> to vector<4x256xf32>
    %31 = arith.mulf %28, %30 : vector<4x256xf32>
    %c24 = arith.constant 24 : index
    %c0_16 = arith.constant 0 : index
    %32 = vector.load %arg7[%c24, %c0_16] : memref<36x256xf32, #tpu.memory_space<vmem>>, vector<4x256xf32>
    tpu.vector_store %arg7[%c24, %c0_16], %31 {strides = array<i32>} : memref<36x256xf32, #tpu.memory_space<vmem>>, vector<4x256xf32>,
    %c240_i32 = arith.constant 240 : i32
    %33 = tpu.dynamic_rotate %1 by %c240_i32 dim 1 : vector<4x256xf32>, i32 -> vector<4x256xf32>
    %c7 = arith.constant 7 : index
    %c0_17 = arith.constant 0 : index
    %34 = vector.load %arg4[%c7, %c0_17] : memref<9x256xf32, #tpu.memory_space<vmem>>, vector<1x256xf32>
    %35 = vector.broadcast %34 : vector<1x256xf32> to vector<4x256xf32>
    %36 = arith.mulf %33, %35 : vector<4x256xf32>
    %c28 = arith.constant 28 : index
    %c0_18 = arith.constant 0 : index
    %37 = vector.load %arg7[%c28, %c0_18] : memref<36x256xf32, #tpu.memory_space<vmem>>, vector<4x256xf32>
    tpu.vector_store %arg7[%c28, %c0_18], %36 {strides = array<i32>} : memref<36x256xf32, #tpu.memory_space<vmem>>, vector<4x256xf32>,
    %c239_i32 = arith.constant 239 : i32
    %38 = tpu.dynamic_rotate %1 by %c239_i32 dim 1 : vector<4x256xf32>, i32 -> vector<4x256xf32>
    %c8_19 = arith.constant 8 : index
    %c0_20 = arith.constant 0 : index
    %39 = vector.load %arg4[%c8_19, %c0_20] : memref<9x256xf32, #tpu.memory_space<vmem>>, vector<1x256xf32>
    %40 = vector.broadcast %39 : vector<1x256xf32> to vector<4x256xf32>
    %41 = arith.mulf %38, %40 : vector<4x256xf32>
    %c32 = arith.constant 32 : index
    %c0_21 = arith.constant 0 : index
    %42 = vector.load %arg7[%c32, %c0_21] : memref<36x256xf32, #tpu.memory_space<vmem>>, vector<4x256xf32>
    tpu.vector_store %arg7[%c32, %c0_21], %41 {strides = array<i32>} : memref<36x256xf32, #tpu.memory_space<vmem>>, vector<4x256xf32>,
    %c0_22 = arith.constant 0 : index
    %c0_23 = arith.constant 0 : index
    %43 = vector.load %arg3[%c0_22, %c0_23] : memref<8x36xf32, #tpu.memory_space<vmem>>, vector<8x36xf32>
    %c0_24 = arith.constant 0 : index
    %c0_25 = arith.constant 0 : index
    %44 = vector.load %arg7[%c0_24, %c0_25] : memref<36x256xf32, #tpu.memory_space<vmem>>, vector<36x256xf32>
    %cst = arith.constant dense<0.000000e+00> : vector<8x256xf32>
    %45 = tpu.matmul %43, %44, %cst {dimension_numbers = #tpu.dot_dimension_numbers<[1], [0], [0], [1], [0, 0, 1, 1], [], []>, precision = #tpu.contract_precision<fp32>} : vector<8x36xf32>, vector<36x256xf32>, vector<8x256xf32> -> vector<8x256xf32>
    %c0_26 = arith.constant 0 : index
    %c0_27 = arith.constant 0 : index
    %46 = vector.load %arg5[%c0_26, %c0_27] : memref<8x1xf32, #tpu.memory_space<vmem>>, vector<8x1xf32>
    %47 = vector.broadcast %46 : vector<8x1xf32> to vector<8x256xf32>
    %48 = arith.addf %45, %47 : vector<8x256xf32>
    %49 = arith.negf %48 : vector<8x256xf32>
    %50 = math.exp %49 : vector<8x256xf32>
    %cst_28 = arith.constant 1.000000e+00 : f32
    %51 = vector.broadcast %cst_28 : f32 to vector<8x256xf32>
    %52 = arith.addf %51, %50 : vector<8x256xf32>
    %53 = arith.divf %51, %52 : vector<8x256xf32>
    %54 = arith.mulf %48, %53 : vector<8x256xf32>
    %c0_29 = arith.constant 0 : index
    %c0_30 = arith.constant 0 : index
    %c0_31 = arith.constant 0 : index
    %55 = vector.load %arg6[%c0_29, %c0_30, %c0_31] : memref<1x8x256xf32, #tpu.memory_space<vmem>>, vector<1x8x256xf32>
    %56 = vector.shape_cast %55 : vector<1x8x256xf32> to vector<8x256xf32>
    %57 = vector.shape_cast %54 : vector<8x256xf32> to vector<1x8x256xf32>
    tpu.vector_store %arg6[%c0_29, %c0_30, %c0_31], %57 {strides = array<i32>} : memref<1x8x256xf32, #tpu.memory_space<vmem>>, vector<1x8x256xf32>,
    return
  }
  func.func @transform_0(%arg0: i32, %arg1: i32) -> (i32, i32, i32) {
    %c0_i32 = arith.constant 0 : i32
    %c0_i32_0 = arith.constant 0 : i32
    %c0_i32_1 = arith.constant 0 : i32
    return %arg0, %c0_i32, %c0_i32_0 : i32, i32, i32
  }
  func.func @transform_1(%arg0: i32, %arg1: i32) -> (i32, i32) {
    %c0_i32 = arith.constant 0 : i32
    %c0_i32_0 = arith.constant 0 : i32
    return %arg1, %c0_i32 : i32, i32
  }
  func.func @transform_2(%arg0: i32, %arg1: i32) -> (i32, i32) {
    %c0_i32 = arith.constant 0 : i32
    %c0_i32_0 = arith.constant 0 : i32
    %c0_i32_1 = arith.constant 0 : i32
    return %c0_i32, %c0_i32_0 : i32, i32
  }
  func.func @transform_3(%arg0: i32, %arg1: i32) -> (i32, i32) {
    %c0_i32 = arith.constant 0 : i32
    %c0_i32_0 = arith.constant 0 : i32
    return %arg1, %c0_i32 : i32, i32
  }
  func.func @transform_4(%arg0: i32, %arg1: i32) -> (i32, i32, i32) {
    %c0_i32 = arith.constant 0 : i32
    %c0_i32_0 = arith.constant 0 : i32
    return %arg0, %arg1, %c0_i32 : i32, i32, i32
  }
}

</mosaic_0001>

<llo_original>
// kernel: tpu_custom_call.1
$region0: #{tpu_custom_call.1}
  #allocation0 [shape = 'u32[]', space=smem, size = 0x4, offset = 0x4, fixed_abs, tag = 'smem constant byte address 0x4 - core index']
  #allocation1 [shape = 'u32[144,128]{1,0:T(1,128)}', space=vmem, size = 0x12000, scoped, tag = 'internal scratch']
  #allocation2 [shape = 'f32[36,256]{1,0:T(8,128)}', space=vmem, size = 0xa000, scoped, tag = 'scratch operand']
  %s0 = inlined_call_operand.hbm [shape: f32[2,4,256], index: 0, kind: input, shape index: {}]
  %s1 = inlined_call_operand.vmem [shape: f32[8,36], index: 1, kind: input, shape index: {}]
  %s2 = inlined_call_operand.hbm [shape: f32[9,256], index: 2, kind: input, shape index: {}]
  %s3 = inlined_call_operand.vmem [shape: f32[8,1], index: 3, kind: input, shape index: {}]
  %s4 = inlined_call_operand.hbm [shape: f32[2,8,256], index: 4, kind: output, shape index: {}]
  %s5 = sld [smem:[#allocation0]]
  $region57: #{tpu_custom_call.1} parent=0
    _
  %s7 = ssub.s32 1, %s5
  %s8 = scalar_select 0, %s7, %s5
  $region1: #{tpu_custom_call.1} parent=0
    #allocation3 [shape = 'u8[8192]{0}', space=vmem, size = 0x2000, scoped, tag = 'input window, operand 0']
    #allocation4 [shape = 's32[2]{0}', space=sflag, size = 0x8, scoped, tag = 'scoped memory for tpu_custom_call.1']
    #allocation5 [shape = 's32[2]{0}', space=sflag, size = 0x8, scoped, tag = 'scoped memory for tpu_custom_call.1']
    #allocation6 [shape = 'u8[16384]{0}', space=vmem, size = 0x4000, scoped, tag = 'input window, operand 2, single buffered']
    #allocation7 [shape = 's32[1]{0}', space=sflag, size = 0x4, scoped, tag = 'scoped memory for tpu_custom_call.1']
    #allocation8 [shape = 'u8[16384]{0}', space=vmem, size = 0x4000, scoped, tag = 'output window, operand 0']
    %9 = vsyncpa [#allocation4], 0
    %s10 = scalar_lea.sflag [#allocation4], 1
    %11 = vsyncpa %s10, 0
    %12 = vsyncpa [#allocation7], 0
    %13 = vsyncpa [#allocation5], 0
    %s14 = scalar_lea.sflag [#allocation5], 1
    %15 = vsyncpa %s14, 0
    loop: start=0, step=1, limit=4
    $region2: #{tpu_custom_call.1} parent=1 // loop_pre_header
      _
    $region3: #{tpu_custom_call.1} parent=1 // loop_header
      %s17 = sphi 0, %s21
      %p18 = scmp.ge.s32.totalorder %s17, 4
      %s24 = sphi 0, %s36
      %s25 = sphi 0, %s32
      %s26 = sphi 0, %s24
      %s27 = sphi 0, %s25
      %s28 = sphi 0, %s26
      %s29 = sphi 0, %s27
      %s39 = sphi 0, %s41
      %s42 = sphi 0, %s39
      %s43 = sphi 0, %s42
      %s59 = sphi 0, %s43
      %s65 = sphi 0, %s67
      %s68 = sphi 0, %s65
      %s69 = sphi 0, %s68
      %s85 = sphi 0, %s69
      %s89 = sphi 0, %s89
      %s91 = sphi 0, %s89
      %s92 = sphi 0, %s91
      %s106 = sphi 0, %s92
      %s112 = sphi 0, %s114
      %s115 = sphi 0, %s112
      %s116 = sphi 0, %s115
      %s132 = sphi 0, %s116
      %s140 = sphi 0, %s142
      %s143 = sphi 0, %s140
      %s144 = sphi 0, %s143
      %s160 = sphi 0, %s144
    $region4: #{tpu_custom_call.1} parent=1 // loop_header_branch
      %20 = sbr.rel (%p18) target = $region8
    $region5: #{tpu_custom_call.1} parent=1 // loop_body
      %s22 = ssub.s32 %s17, 1
      %s23 = ssub.s32 %s17, 2
      %s30 = sadd.s32 1, %s25
      %p31 = scmp.ge.s32.totalorder %s30, 1
      %s32 = scalar_select %p31, 0, %s30
      %s33 = sadd.s32 1, %s24
      %s34 = scalar_select %p31, %s33, %s24
      %p35 = scmp.ge.s32.totalorder %s34, 2
      %s36 = scalar_select %p35, 0, %s34
      %s37 = ssub.s32 %s24, %s36
      %p38 = scmp.eq.s32.totalorder %s37, 0
      %s40 = sadd.s32 %s39, 1
      %s41 = scalar_select %p38, %s39, %s40
      %p44 = pneg %p38
      %p45 = scmp.eq.s32.totalorder %s17, 1
      %p46 = por %p44, %p45
      %p47 = scmp.ne.s32.totalorder %s39, %s42
      %p48 = scmp.eq.s32.totalorder %s17, 0
      %p49 = por %p47, %p48
      %p50 = scmp.ne.s32.totalorder %s39, %s42
      %p51 = scmp.eq.s32.totalorder %s22, 1
      %p52 = por %p50, %p51
      %p53 = scmp.ne.s32.totalorder %s42, %s43
      %p54 = scmp.eq.s32.totalorder %s22, 0
      %p55 = por %p53, %p54
      %p56 = scmp.ne.s32.totalorder %s42, %s43
      %p57 = scmp.eq.s32.totalorder %s23, 1
      %p58 = por %p56, %p57
      %p60 = scmp.ne.s32.totalorder %s43, %s59
      %p61 = scmp.eq.s32.totalorder %s23, 0
      %p62 = por %p60, %p61
      %s63 = ssub.s32 %s25, %s32
      %p64 = scmp.eq.s32.totalorder %s63, 0
      %s66 = sadd.s32 %s65, 1
      %s67 = scalar_select %p64, %s65, %s66
      %p70 = pneg %p64
      %p71 = scmp.eq.s32.totalorder %s17, 1
      %p72 = por %p70, %p71
      %p73 = scmp.ne.s32.totalorder %s65, %s68
      %p74 = scmp.eq.s32.totalorder %s17, 0
      %p75 = por %p73, %p74
      %p76 = scmp.ne.s32.totalorder %s65, %s68
      %p77 = scmp.eq.s32.totalorder %s22, 1
      %p78 = por %p76, %p77
      %p79 = scmp.ne.s32.totalorder %s68, %s69
      %p80 = scmp.eq.s32.totalorder %s22, 0
      %p81 = por %p79, %p80
      %p82 = scmp.ne.s32.totalorder %s68, %s69
      %p83 = scmp.eq.s32.totalorder %s23, 1
      %p84 = por %p82, %p83
      %p86 = scmp.ne.s32.totalorder %s69, %s85
      %p87 = scmp.eq.s32.totalorder %s23, 0
      %p88 = por %p86, %p87
      %s90 = sadd.s32 %s89, 1
      %p93 = scmp.eq.s32.totalorder %s17, 1
      %p94 = scmp.ne.s32.totalorder %s89, %s91
      %p95 = scmp.eq.s32.totalorder %s17, 0
      %p96 = por %p94, %p95
      %p97 = scmp.ne.s32.totalorder %s89, %s91
      %p98 = scmp.eq.s32.totalorder %s22, 1
      %p99 = por %p97, %p98
      %p100 = scmp.ne.s32.totalorder %s91, %s92
      %p101 = scmp.eq.s32.totalorder %s22, 0
      %p102 = por %p100, %p101
      %p103 = scmp.ne.s32.totalorder %s91, %s92
      %p104 = scmp.eq.s32.totalorder %s23, 1
      %p105 = por %p103, %p104
      %p107 = scmp.ne.s32.totalorder %s92, %s106
      %p108 = scmp.eq.s32.totalorder %s23, 0
      %p109 = por %p107, %p108
      %s110 = ssub.s32 %s25, %s32
      %p111 = scmp.eq.s32.totalorder %s110, 0
      %s113 = sadd.s32 %s112, 1
      %s114 = scalar_select %p111, %s112, %s113
      %p117 = pneg %p111
      %p118 = scmp.eq.s32.totalorder %s17, 1
      %p119 = por %p117, %p118
      %p120 = scmp.ne.s32.totalorder %s112, %s115
      %p121 = scmp.eq.s32.totalorder %s17, 0
      %p122 = por %p120, %p121
      %p123 = scmp.ne.s32.totalorder %s112, %s115
      %p124 = scmp.eq.s32.totalorder %s22, 1
      %p125 = por %p123, %p124
      %p126 = scmp.ne.s32.totalorder %s115, %s116
      %p127 = scmp.eq.s32.totalorder %s22, 0
      %p128 = por %p126, %p127
      %p129 = scmp.ne.s32.totalorder %s115, %s116
      %p130 = scmp.eq.s32.totalorder %s23, 1
      %p131 = por %p129, %p130
      %p133 = scmp.ne.s32.totalorder %s116, %s132
      %p134 = scmp.eq.s32.totalorder %s23, 0
      %p135 = por %p133, %p134
      %s136 = ssub.s32 %s24, %s36
      %s137 = ssub.s32 %s25, %s32
      %s138 = sor.u32 %s136, %s137
      %p139 = scmp.eq.s32.totalorder %s138, 0
      %s141 = sadd.s32 %s140, 1
      %s142 = scalar_select %p139, %s140, %s141
      %p145 = pneg %p139
      %p146 = scmp.eq.s32.totalorder %s17, 1
      %p147 = por %p145, %p146
      %p148 = scmp.ne.s32.totalorder %s140, %s143
      %p149 = scmp.eq.s32.totalorder %s17, 0
      %p150 = por %p148, %p149
      %p151 = scmp.ne.s32.totalorder %s140, %s143
      %p152 = scmp.eq.s32.totalorder %s22, 1
      %p153 = por %p151, %p152
      %p154 = scmp.ne.s32.totalorder %s143, %s144
      %p155 = scmp.eq.s32.totalorder %s22, 0
      %p156 = por %p154, %p155
      %p157 = scmp.ne.s32.totalorder %s143, %s144
      %p158 = scmp.eq.s32.totalorder %s23, 1
      %p159 = por %p157, %p158
      %p161 = scmp.ne.s32.totalorder %s144, %s160
      %p162 = scmp.eq.s32.totalorder %s23, 0
      %p163 = por %p161, %p162
      %p164 = scmp.le.s32.totalorder 1, %s17
      %p165 = scmp.lt.s32.totalorder %s17, 3
      %p166 = pnand %p164, %p165
      %p167 = pneg %p166
      // Predicated region
      $region9: #{tpu_custom_call.1} parent=5 // pred_check
        _
      $region10: #{tpu_custom_call.1} parent=5 // pred_check_branch
        %169 = sbr.rel (%p166) target = $region12
      $region11: #{tpu_custom_call.1} parent=5 // pred_region
        %s170 = ssub.s32 %s17, 1
        // Predicated region
        $region13: #{tpu_custom_call.1} parent=11 // pred_check
          %p171 = pneg %p81
        $region14: #{tpu_custom_call.1} parent=11 // pred_check_branch
          %173 = sbr.rel (%p171) target = $region16
        $region15: #{tpu_custom_call.1} parent=11 // pred_region
          %p174 = scmp.lt.s32.totalorder %s27, 0
          %s175 = scalar_select %p174, %s27, 0
          %s176 = smul.addr %s175, 8
          %s177 = scalar_lea.vmem %s1, %s176
        $region16: #{tpu_custom_call.1} parent=11 // pred_fallthru
          _
        // Predicated region
        $region17: #{tpu_custom_call.1} parent=11 // pred_check
          %p178 = pneg %p102
        $region18: #{tpu_custom_call.1} parent=11 // pred_check_branch
          %180 = sbr.rel (%p178) target = $region20
        $region19: #{tpu_custom_call.1} parent=11 // pred_region
          %s182 = ssub.s32 512, 512
          %183 = vsyncadd [#allocation7], %s182
          %s184 = sshll.u32 [#allocation6], 4
          %s185 = int_to_ptr.vmem [resolvable:$true] %s184
          %190 = dma.hbm_to_vmem [thread:$0]  %s2, 512, %s185, [#allocation7], 256, 256, 16
        $region20: #{tpu_custom_call.1} parent=11 // pred_fallthru
          _
        // Predicated region
        $region21: #{tpu_custom_call.1} parent=11 // pred_check
          %p191 = pneg %p128
        $region22: #{tpu_custom_call.1} parent=11 // pred_check_branch
          %193 = sbr.rel (%p191) target = $region24
        $region23: #{tpu_custom_call.1} parent=11 // pred_region
          %p194 = scmp.lt.s32.totalorder %s27, 0
          %s195 = scalar_select %p194, %s27, 0
          %s196 = smul.addr %s195, 8
          %s197 = scalar_lea.vmem %s3, %s196
        $region24: #{tpu_custom_call.1} parent=11 // pred_fallthru
          _
      $region12: #{tpu_custom_call.1} parent=5 // pred_fallthru
        _
      %p198 = scmp.lt.s32.totalorder %s17, 2
      // Predicated region
      $region25: #{tpu_custom_call.1} parent=5 // pred_check
        %p199 = pneg %p198
      $region26: #{tpu_custom_call.1} parent=5 // pred_check_branch
        %201 = sbr.rel (%p199) target = $region28
      $region27: #{tpu_custom_call.1} parent=5 // pred_region
        // Predicated region
        $region29: #{tpu_custom_call.1} parent=27 // pred_check
          %p202 = pneg %p49
        $region30: #{tpu_custom_call.1} parent=27 // pred_check_branch
          %204 = sbr.rel (%p202) target = $region32
        $region31: #{tpu_custom_call.1} parent=27 // pred_region
          %s205 = sand.u32 %s39, 1
          %s206 = scalar_lea.sflag [#allocation4], %s205
          %s207 = sand.u32 %s39, 1
          %s208 = smul.addr %s207, 8
          %s209 = scalar_lea.vmem [#allocation3], %s208
          %s211 = ssub.s32 128, 128
          %212 = vsyncadd %s206, %s211
          %s213 = smul.addr %s24, 2
          %s214 = smul.addr %s213, 64
          %s215 = scalar_lea.hbm %s0, %s214
          %s217 = sshll.u32 %s209, 4
          %s218 = int_to_ptr.vmem [resolvable:$true] %s217
          %220 = dma.hbm_to_vmem [thread:$0]  %s215, 128, %s218, %s206
        $region32: #{tpu_custom_call.1} parent=27 // pred_fallthru
          _
      $region28: #{tpu_custom_call.1} parent=5 // pred_fallthru
        _
      %p221 = scmp.le.s32.totalorder 1, %s17
      %p222 = scmp.lt.s32.totalorder %s17, 3
      %p223 = pnand %p221, %p222
      %p224 = pneg %p223
      // Predicated region
      $region33: #{tpu_custom_call.1} parent=5 // pred_check
        _
      $region34: #{tpu_custom_call.1} parent=5 // pred_check_branch
        %226 = sbr.rel (%p223) target = $region36
      $region35: #{tpu_custom_call.1} parent=5 // pred_region
        %s227 = ssub.s32 %s17, 1
        %s228 = sand.u32 %s42, 1
        %s229 = scalar_lea.sflag [#allocation4], %s228
        %s230 = sand.u32 %s42, 1
        %s231 = smul.addr %s230, 8
        %s232 = scalar_lea.vmem [#allocation3], %s231
        // Predicated region
        $region37: #{tpu_custom_call.1} parent=35 // pred_check
          %p233 = pneg %p55
        $region38: #{tpu_custom_call.1} parent=35 // pred_check_branch
          %235 = sbr.rel (%p233) target = $region40
        $region39: #{tpu_custom_call.1} parent=35 // pred_region
          %236 = dma.done %s229, 128
        $region40: #{tpu_custom_call.1} parent=35 // pred_fallthru
          _
        // Predicated region
        $region41: #{tpu_custom_call.1} parent=35 // pred_check
          %p237 = pneg %p102
        $region42: #{tpu_custom_call.1} parent=35 // pred_check_branch
          %239 = sbr.rel (%p237) target = $region44
        $region43: #{tpu_custom_call.1} parent=35 // pred_region
          %240 = dma.done [#allocation7], 512
        $region44: #{tpu_custom_call.1} parent=35 // pred_fallthru
          _
        %s241 = sand.u32 %s42, 1
        %s242 = scalar_lea.sflag [#allocation4], %s241
        %s243 = sand.u32 %s42, 1
        %s244 = smul.addr %s243, 8
        %s245 = scalar_lea.vmem [#allocation3], %s244
        %p246 = pneg %p55
        %p247 = pneg %p52
        %p248 = scmp.lt.s32.totalorder %s27, 0
        %s249 = scalar_select %p248, %s27, 0
        %s250 = smul.addr %s249, 8
        %s251 = scalar_lea.vmem %s1, %s250
        %p252 = pneg %p81
        %p253 = pneg %p78
        %p254 = pneg %p102
        %p255 = pneg %p99
        %p256 = scmp.lt.s32.totalorder %s27, 0
        %s257 = scalar_select %p256, %s27, 0
        %s258 = smul.addr %s257, 8
        %s259 = scalar_lea.vmem %s3, %s258
        %p260 = pneg %p128
        %p261 = pneg %p125
        %p262 = pneg %p156
        %p263 = pneg %p153
        %s264 = sand.u32 %s143, 1
        %s265 = scalar_lea.sflag [#allocation5], %s264
        %s266 = sand.u32 %s143, 1
        %s267 = smul.addr %s266, 16
        %s268 = scalar_lea.vmem [#allocation8], %s267
        %p269 = scmp.lt.s32.totalorder %s27, 0
        %s270 = scalar_select %p269, %s27, 0
        %s271 = smul.addr %s270, 8
        %s272 = scalar_lea.vmem %s1, %s271
        %p273 = scmp.lt.s32.totalorder %s27, 0
        %s274 = scalar_select %p273, %s27, 0
        %s275 = smul.addr %s274, 8
        %s276 = scalar_lea.vmem %s3, %s275
        %v277 = vld [vmem:[%s232] sm:$0xff]
        %v279 = vcombine.high %v277, %v277
        %281 = vrot.lane.b32.xlu0 %v277, 17
        %v282 = vpop.permute.xlu0 %281
        %283 = vrot.lane.b32.xlu0 %v279, 17
        %v284 = vpop.permute.xlu0 %283
        %v285 = vlaneseq
        %v286 = vand.u32 %v285, 127
        %vm287 = vcmp.lt.s32.totalorder %v286, 17
        %v288 = vsel %vm287, %v282, %v284
        %v289 = vsel %vm287, %v284, %v282
        %v290 = vld [vmem:[#allocation6] ss:$8 sm:$0x3]
        %v292 = vlaneseq
        %v293 = vshrl.u32 %v292, 7
        %v294 = vsub.s32 0, %v293
        %v295 = vrot.slane %v290, %v294
        %v296 = vlaneseq
        %v297 = vshrl.u32 %v296, 7
        %v298 = vsub.s32 1, %v297
        %v299 = vrot.slane %v290, %v298
        %v302 = vmul.f32 %v289, %v295
        %v303 = vmul.f32 %v288, %v299
        %304 = vst [vmem:[#allocation2] sm:$0xf] %v302
        %305 = vst [vmem:[#allocation2 + $0x8] sm:$0xf] %v303
        %306 = vrot.lane.b32.xlu0 %v277, 16
        %v307 = vpop.permute.xlu0 %306
        %308 = vrot.lane.b32.xlu0 %v279, 16
        %v309 = vpop.permute.xlu0 %308
        %vm310 = vcmp.lt.s32.totalorder %v286, 16
        %v311 = vsel %vm310, %v307, %v309
        %v312 = vsel %vm310, %v309, %v307
        %s313 = scalar_lea.vmem [#allocation6], 1
        %v314 = vld [vmem:[%s313] ss:$8 sm:$0x3]
        %v316 = vlaneseq
        %v317 = vshrl.u32 %v316, 7
        %v318 = vsub.s32 0, %v317
        %v319 = vrot.slane %v314, %v318
        %v320 = vlaneseq
        %v321 = vshrl.u32 %v320, 7
        %v322 = vsub.s32 1, %v321
        %v323 = vrot.slane %v314, %v322
        %v326 = vmul.f32 %v312, %v319
        %v327 = vmul.f32 %v311, %v323
        %v330 = vrot.slane %v326, 4
        %v331 = vrot.slane %v327, 4
        %334 = vst [vmem:[#allocation2] sm:$0xf0] %v330
        %335 = vst [vmem:[#allocation2 + $0x8] sm:$0xf0] %v331
        %336 = vrot.lane.b32.xlu0 %v277, 15
        %v337 = vpop.permute.xlu0 %336
        %338 = vrot.lane.b32.xlu0 %v279, 15
        %v339 = vpop.permute.xlu0 %338
        %vm340 = vcmp.lt.s32.totalorder %v286, 15
        %v341 = vsel %vm340, %v337, %v339
        %v342 = vsel %vm340, %v339, %v337
        %s343 = scalar_lea.vmem [#allocation6], 2
        %v344 = vld [vmem:[%s343] ss:$8 sm:$0x3]
        %v346 = vlaneseq
        %v347 = vshrl.u32 %v346, 7
        %v348 = vsub.s32 0, %v347
        %v349 = vrot.slane %v344, %v348
        %v350 = vlaneseq
        %v351 = vshrl.u32 %v350, 7
        %v352 = vsub.s32 1, %v351
        %v353 = vrot.slane %v344, %v352
        %v356 = vmul.f32 %v342, %v349
        %v357 = vmul.f32 %v341, %v353
        %358 = vst [vmem:[#allocation2 + $0x10] sm:$0xf] %v356
        %359 = vst [vmem:[#allocation2 + $0x18] sm:$0xf] %v357
        %360 = vrot.lane.b32.xlu0 %v277, 1
        %v361 = vpop.permute.xlu0 %360
        %362 = vrot.lane.b32.xlu0 %v279, 1
        %v363 = vpop.permute.xlu0 %362
        %vm364 = vcmp.lt.s32.totalorder %v286, 1
        %v365 = vsel %vm364, %v361, %v363
        %v366 = vsel %vm364, %v363, %v361
        %s367 = scalar_lea.vmem [#allocation6], 3
        %v368 = vld [vmem:[%s367] ss:$8 sm:$0x3]
        %v370 = vlaneseq
        %v371 = vshrl.u32 %v370, 7
        %v372 = vsub.s32 0, %v371
        %v373 = vrot.slane %v368, %v372
        %v374 = vlaneseq
        %v375 = vshrl.u32 %v374, 7
        %v376 = vsub.s32 1, %v375
        %v377 = vrot.slane %v368, %v376
        %v380 = vmul.f32 %v366, %v373
        %v381 = vmul.f32 %v365, %v377
        %v384 = vrot.slane %v380, 4
        %v385 = vrot.slane %v381, 4
        %388 = vst [vmem:[#allocation2 + $0x10] sm:$0xf0] %v384
        %389 = vst [vmem:[#allocation2 + $0x18] sm:$0xf0] %v385
        %390 = vst [vmem:[#allocation2 + $0x20] sm:$0xf] %v277
        %391 = vst [vmem:[#allocation2 + $0x28] sm:$0xf] %v279
        %392 = vrot.lane.b32.xlu0 %v277, 127
        %v393 = vpop.permute.xlu0 %392
        %394 = vrot.lane.b32.xlu0 %v279, 127
        %v395 = vpop.permute.xlu0 %394
        %vm396 = vcmp.lt.s32.totalorder %v286, 127
        %v397 = vsel %vm396, %v393, %v395
        %v398 = vsel %vm396, %v395, %v393
        %s399 = scalar_lea.vmem [#allocation6], 5
        %v400 = vld [vmem:[%s399] ss:$8 sm:$0x3]
        %v402 = vlaneseq
        %v403 = vshrl.u32 %v402, 7
        %v404 = vsub.s32 0, %v403
        %v405 = vrot.slane %v400, %v404
        %v406 = vlaneseq
        %v407 = vshrl.u32 %v406, 7
        %v408 = vsub.s32 1, %v407
        %v409 = vrot.slane %v400, %v408
        %v412 = vmul.f32 %v397, %v405
        %v413 = vmul.f32 %v398, %v409
        %v416 = vrot.slane %v412, 4
        %v417 = vrot.slane %v413, 4
        %420 = vst [vmem:[#allocation2 + $0x20] sm:$0xf0] %v416
        %421 = vst [vmem:[#allocation2 + $0x28] sm:$0xf0] %v417
        %422 = vrot.lane.b32.xlu0 %v277, 113
        %v423 = vpop.permute.xlu0 %422
        %424 = vrot.lane.b32.xlu0 %v279, 113
        %v425 = vpop.permute.xlu0 %424
        %vm426 = vcmp.lt.s32.totalorder %v286, 113
        %v427 = vsel %vm426, %v423, %v425
        %v428 = vsel %vm426, %v425, %v423
        %s429 = scalar_lea.vmem [#allocation6], 6
        %v430 = vld [vmem:[%s429] ss:$8 sm:$0x3]
        %v432 = vlaneseq
        %v433 = vshrl.u32 %v432, 7
        %v434 = vsub.s32 0, %v433
        %v435 = vrot.slane %v430, %v434
        %v436 = vlaneseq
        %v437 = vshrl.u32 %v436, 7
        %v438 = vsub.s32 1, %v437
        %v439 = vrot.slane %v430, %v438
        %v442 = vmul.f32 %v427, %v435
        %v443 = vmul.f32 %v428, %v439
        %444 = vst [vmem:[#allocation2 + $0x30] sm:$0xf] %v442
        %445 = vst [vmem:[#allocation2 + $0x38] sm:$0xf] %v443
        %446 = vrot.lane.b32.xlu0 %v277, 112
        %v447 = vpop.permute.xlu0 %446
        %448 = vrot.lane.b32.xlu0 %v279, 112
        %v449 = vpop.permute.xlu0 %448
        %vm450 = vcmp.lt.s32.totalorder %v286, 112
        %v451 = vsel %vm450, %v447, %v449
        %v452 = vsel %vm450, %v449, %v447
        %s453 = scalar_lea.vmem [#allocation6], 7
        %v454 = vld [vmem:[%s453] ss:$8 sm:$0x3]
        %v456 = vlaneseq
        %v457 = vshrl.u32 %v456, 7
        %v458 = vsub.s32 0, %v457
        %v459 = vrot.slane %v454, %v458
        %v460 = vlaneseq
        %v461 = vshrl.u32 %v460, 7
        %v462 = vsub.s32 1, %v461
        %v463 = vrot.slane %v454, %v462
        %v466 = vmul.f32 %v451, %v459
        %v467 = vmul.f32 %v452, %v463
        %v470 = vrot.slane %v466, 4
        %v471 = vrot.slane %v467, 4
        %474 = vst [vmem:[#allocation2 + $0x30] sm:$0xf0] %v470
        %475 = vst [vmem:[#allocation2 + $0x38] sm:$0xf0] %v471
        %476 = vrot.lane.b32.xlu0 %v277, 111
        %v477 = vpop.permute.xlu0 %476
        %478 = vrot.lane.b32.xlu0 %v279, 111
        %v479 = vpop.permute.xlu0 %478
        %vm480 = vcmp.lt.s32.totalorder %v286, 111
        %v481 = vsel %vm480, %v477, %v479
        %v482 = vsel %vm480, %v479, %v477
        %s483 = scalar_lea.vmem [#allocation6], 16
        %v484 = vld [vmem:[%s483] ss:$8 sm:$0x3]
        %v486 = vlaneseq
        %v487 = vshrl.u32 %v486, 7
        %v488 = vsub.s32 0, %v487
        %v489 = vrot.slane %v484, %v488
        %v490 = vlaneseq
        %v491 = vshrl.u32 %v490, 7
        %v492 = vsub.s32 1, %v491
        %v493 = vrot.slane %v484, %v492
        %v496 = vmul.f32 %v481, %v489
        %v497 = vmul.f32 %v482, %v493
        %498 = vst [vmem:[#allocation2 + $0x40] sm:$0xf] %v496
        %499 = vst [vmem:[#allocation2 + $0x48] sm:$0xf] %v497
        %v500 = vld [vmem:[%s272] sm:$0xff]
        %v501 = vld [vmem:[#allocation2] sm:$0xff]
        %v502 = vld [vmem:[#allocation2 + $0x8] sm:$0xff]
        %v503 = vld [vmem:[#allocation2 + $0x10] sm:$0xff]
        %v504 = vld [vmem:[#allocation2 + $0x18] sm:$0xff]
        %v505 = vld [vmem:[#allocation2 + $0x20] sm:$0xff]
        %v506 = vld [vmem:[#allocation2 + $0x28] sm:$0xff]
        %v507 = vld [vmem:[#allocation2 + $0x30] sm:$0xff]
        %v508 = vld [vmem:[#allocation2 + $0x38] sm:$0xff]
        %v509 = vld [vmem:[#allocation2 + $0x40] sm:$0xf]
        %v510 = vld [vmem:[#allocation2 + $0x48] sm:$0xf]
        %v511 = vld [vmem:[%s276] sm:$0xff]
        %513 = vset.pattern.permute.xlu0 0
        %514 = vperm.xlu0 %513, %v511
        %v515 = vpop.permute.xlu0 %514
        %vm517 = vcmask 293888
        %v519 = vsel %vm517, %v500, 0
        %vm521 = vcmask 1043456
        %v523 = vsel %vm521, %v509, 0
        %v526 = vsel %vm521, %v510, 0
        %528 = vmatprep.subr.mxu0 0.0
        %529 = vmatpush1.msra.mxu0 0.0
        %530 = vmatprep.subr.mxu0 0.0
        %531 = vmatpush1.msra.mxu0 0.0
        %532 = vmatprep.subr.mxu0 0.0
        %533 = vmatpush1.msra.mxu0 0.0
        %534 = vmatprep.subr.mxu0 0.0
        %535 = vmatpush1.msra.mxu0 0.0
        %536 = vmatprep.subr.mxu0 0.0
        %537 = vmatpush1.msra.mxu0 0.0
        %538 = vmatprep.subr.mxu0 0.0
        %539 = vmatpush1.msra.mxu0 0.0
        %540 = vmatprep.subr.mxu0 0.0
        %541 = vmatpush1.msra.mxu0 0.0
        %542 = vmatprep.subr.mxu0 0.0
        %543 = vmatpush1.msra.mxu0 0.0
        %544 = vmatprep.subr.mxu0 0.0
        %545 = vmatpush1.msra.mxu0 0.0
        %546 = vmatprep.subr.mxu0 0.0
        %547 = vmatpush1.msra.mxu0 0.0
        %548 = vmatprep.subr.mxu0 0.0
        %549 = vmatpush1.msra.mxu0 0.0
        %v550 = vand.u32 %v526, 4294901760
        %551 = vmatprep.subr.mxu0 %v550
        %v552 = vand.u32 %v523, 4294901760
        %553 = vmatpush1.msra.mxu0 %v552
        %v554 = vand.u32 %v508, 4294901760
        %555 = vmatprep.subr.mxu0 %v554
        %v556 = vand.u32 %v507, 4294901760
        %557 = vmatpush1.msra.mxu0 %v556
        %v558 = vand.u32 %v506, 4294901760
        %559 = vmatprep.subr.mxu0 %v558
        %v560 = vand.u32 %v505, 4294901760
        %561 = vmatpush1.msra.mxu0 %v560
        %v562 = vand.u32 %v504, 4294901760
        %563 = vmatprep.subr.mxu0 %v562
        %v564 = vand.u32 %v503, 4294901760
        %565 = vmatpush1.msra.mxu0 %v564
        %v566 = vand.u32 %v502, 4294901760
        %567 = vmatprep.subr.mxu0 %v566
        %v568 = vand.u32 %v501, 4294901760
        %569 = vmatpush1.msra.mxu0 %v568
        %570 = vmatprep.subr.mxu0 0.0
        %571 = vmatpush2.msra.mxu0 0.0
        %572 = vmatprep.subr.mxu0 0.0
        %573 = vmatpush2.msra.mxu0 0.0
        %574 = vmatprep.subr.mxu0 0.0
        %575 = vmatpush2.msra.mxu0 0.0
        %576 = vmatprep.subr.mxu0 0.0
        %577 = vmatpush2.msra.mxu0 0.0
        %578 = vmatprep.subr.mxu0 0.0
        %579 = vmatpush2.msra.mxu0 0.0
        %580 = vmatprep.subr.mxu0 0.0
        %581 = vmatpush2.msra.mxu0 0.0
        %582 = vmatprep.subr.mxu0 0.0
        %583 = vmatpush2.msra.mxu0 0.0
        %584 = vmatprep.subr.mxu0 0.0
        %585 = vmatpush2.msra.mxu0 0.0
        %586 = vmatprep.subr.mxu0 0.0
        %587 = vmatpush2.msra.mxu0 0.0
        %588 = vmatprep.subr.mxu0 0.0
        %589 = vmatpush2.msra.mxu0 0.0
        %590 = vmatprep.subr.mxu0 0.0
        %591 = vmatpush2.msra.mxu0 0.0
        %592 = vmatprep.subr.mxu0 0.0
        %593 = vmatpush2.msra.mxu0 0.0
        %594 = vmatprep.subr.mxu0 0.0
        %595 = vmatpush2.msra.mxu0 0.0
        %596 = vmatprep.subr.mxu0 0.0
        %597 = vmatpush2.msra.mxu0 0.0
        %598 = vmatprep.subr.mxu0 0.0
        %599 = vmatpush2.msra.mxu0 0.0
        %600 = vmatprep.subr.mxu0 0.0
        %601 = vmatpush2.msra.mxu0 0.0
        %602 = vmatprep.mubr.f32.mxu0 0.0
        %v603 = vand.u32 %v519, 4294901760
        %v604 = vsub.f32 %v519, %v603
        %v605 = vand.u32 %v604, 4294901760
        %v606 = vsub.f32 %v604, %v605
        %v607 = vand.u32 %v606, 4294901760
        %608 = vmatmul.mubr.f32.gmra.mxu0 %v607
        %v609 = vpop.f32.mrf.mxu0
        %v610 = vadd.f32 %v515, %v609
        %v611 = vpop.f32.mrf.mxu0
        %v612 = vadd.f32 %v515, %v611
        %613 = vdwg.mxu0
        %614 = vmatprep.subr.mxu0 0.0
        %615 = vmatpush1.msra.mxu0 0.0
        %616 = vmatprep.subr.mxu0 0.0
        %617 = vmatpush1.msra.mxu0 0.0
        %618 = vmatprep.subr.mxu0 0.0
        %619 = vmatpush1.msra.mxu0 0.0
        %620 = vmatprep.subr.mxu0 0.0
        %621 = vmatpush1.msra.mxu0 0.0
        %622 = vmatprep.subr.mxu0 0.0
        %623 = vmatpush1.msra.mxu0 0.0
        %624 = vmatprep.subr.mxu0 0.0
        %625 = vmatpush1.msra.mxu0 0.0
        %626 = vmatprep.subr.mxu0 0.0
        %627 = vmatpush1.msra.mxu0 0.0
        %628 = vmatprep.subr.mxu0 0.0
        %629 = vmatpush1.msra.mxu0 0.0
        %630 = vmatprep.subr.mxu0 0.0
        %631 = vmatpush1.msra.mxu0 0.0
        %632 = vmatprep.subr.mxu0 0.0
        %633 = vmatpush1.msra.mxu0 0.0
        %634 = vmatprep.subr.mxu0 0.0
        %635 = vmatpush1.msra.mxu0 0.0
        %v636 = vand.u32 %v526, 4294901760
        %v637 = vsub.f32 %v526, %v636
        %v638 = vand.u32 %v637, 4294901760
        %v639 = vsub.f32 %v637, %v638
        %v640 = vand.u32 %v639, 4294901760
        %641 = vmatprep.subr.mxu0 %v640
        %v642 = vand.u32 %v523, 4294901760
        %v643 = vsub.f32 %v523, %v642
        %v644 = vand.u32 %v643, 4294901760
        %v645 = vsub.f32 %v643, %v644
        %v646 = vand.u32 %v645, 4294901760
        %647 = vmatpush1.msra.mxu0 %v646
        %v648 = vand.u32 %v508, 4294901760
        %v649 = vsub.f32 %v508, %v648
        %v650 = vand.u32 %v649, 4294901760
        %v651 = vsub.f32 %v649, %v650
        %v652 = vand.u32 %v651, 4294901760
        %653 = vmatprep.subr.mxu0 %v652
        %v654 = vand.u32 %v507, 4294901760
        %v655 = vsub.f32 %v507, %v654
        %v656 = vand.u32 %v655, 4294901760
        %v657 = vsub.f32 %v655, %v656
        %v658 = vand.u32 %v657, 4294901760
        %659 = vmatpush1.msra.mxu0 %v658
        %v660 = vand.u32 %v506, 4294901760
        %v661 = vsub.f32 %v506, %v660
        %v662 = vand.u32 %v661, 4294901760
        %v663 = vsub.f32 %v661, %v662
        %v664 = vand.u32 %v663, 4294901760
        %665 = vmatprep.subr.mxu0 %v664
        %v666 = vand.u32 %v505, 4294901760
        %v667 = vsub.f32 %v505, %v666
        %v668 = vand.u32 %v667, 4294901760
        %v669 = vsub.f32 %v667, %v668
        %v670 = vand.u32 %v669, 4294901760
        %671 = vmatpush1.msra.mxu0 %v670
        %v672 = vand.u32 %v504, 4294901760
        %v673 = vsub.f32 %v504, %v672
        %v674 = vand.u32 %v673, 4294901760
        %v675 = vsub.f32 %v673, %v674
        %v676 = vand.u32 %v675, 4294901760
        %677 = vmatprep.subr.mxu0 %v676
        %v678 = vand.u32 %v503, 4294901760
        %v679 = vsub.f32 %v503, %v678
        %v680 = vand.u32 %v679, 4294901760
        %v681 = vsub.f32 %v679, %v680
        %v682 = vand.u32 %v681, 4294901760
        %683 = vmatpush1.msra.mxu0 %v682
        %v684 = vand.u32 %v502, 4294901760
        %v685 = vsub.f32 %v502, %v684
        %v686 = vand.u32 %v685, 4294901760
        %v687 = vsub.f32 %v685, %v686
        %v688 = vand.u32 %v687, 4294901760
        %689 = vmatprep.subr.mxu0 %v688
        %v690 = vand.u32 %v501, 4294901760
        %v691 = vsub.f32 %v501, %v690
        %v692 = vand.u32 %v691, 4294901760
        %v693 = vsub.f32 %v691, %v692
        %v694 = vand.u32 %v693, 4294901760
        %695 = vmatpush1.msra.mxu0 %v694
        %696 = vmatprep.subr.mxu0 0.0
        %697 = vmatpush2.msra.mxu0 0.0
        %698 = vmatprep.subr.mxu0 0.0
        %699 = vmatpush2.msra.mxu0 0.0
        %700 = vmatprep.subr.mxu0 0.0
        %701 = vmatpush2.msra.mxu0 0.0
        %702 = vmatprep.subr.mxu0 0.0
        %703 = vmatpush2.msra.mxu0 0.0
        %704 = vmatprep.subr.mxu0 0.0
        %705 = vmatpush2.msra.mxu0 0.0
        %706 = vmatprep.subr.mxu0 0.0
        %707 = vmatpush2.msra.mxu0 0.0
        %708 = vmatprep.subr.mxu0 0.0
        %709 = vmatpush2.msra.mxu0 0.0
        %710 = vmatprep.subr.mxu0 0.0
        %711 = vmatpush2.msra.mxu0 0.0
        %712 = vmatprep.subr.mxu0 0.0
        %713 = vmatpush2.msra.mxu0 0.0
        %714 = vmatprep.subr.mxu0 0.0
        %715 = vmatpush2.msra.mxu0 0.0
        %716 = vmatprep.subr.mxu0 0.0
        %717 = vmatpush2.msra.mxu0 0.0
        %718 = vmatprep.subr.mxu0 0.0
        %719 = vmatpush2.msra.mxu0 0.0
        %720 = vmatprep.subr.mxu0 0.0
        %721 = vmatpush2.msra.mxu0 0.0
        %722 = vmatprep.subr.mxu0 0.0
        %723 = vmatpush2.msra.mxu0 0.0
        %724 = vmatprep.subr.mxu0 0.0
        %725 = vmatpush2.msra.mxu0 0.0
        %726 = vmatprep.subr.mxu0 0.0
        %727 = vmatpush2.msra.mxu0 0.0
        %728 = vmatprep.mubr.f32.mxu0 0.0
        %v729 = vand.u32 %v519, 4294901760
        %730 = vmatmul.mubr.f32.gmra.mxu0 %v729
        %v731 = vpop.f32.mrf.mxu0
        %v732 = vadd.f32 %v610, %v731
        %v733 = vpop.f32.mrf.mxu0
        %v734 = vadd.f32 %v612, %v733
        %735 = vdwg.mxu0
        %736 = vmatprep.subr.mxu0 0.0
        %737 = vmatpush1.msra.mxu0 0.0
        %738 = vmatprep.subr.mxu0 0.0
        %739 = vmatpush1.msra.mxu0 0.0
        %740 = vmatprep.subr.mxu0 0.0
        %741 = vmatpush1.msra.mxu0 0.0
        %742 = vmatprep.subr.mxu0 0.0
        %743 = vmatpush1.msra.mxu0 0.0
        %744 = vmatprep.subr.mxu0 0.0
        %745 = vmatpush1.msra.mxu0 0.0
        %746 = vmatprep.subr.mxu0 0.0
        %747 = vmatpush1.msra.mxu0 0.0
        %748 = vmatprep.subr.mxu0 0.0
        %749 = vmatpush1.msra.mxu0 0.0
        %750 = vmatprep.subr.mxu0 0.0
        %751 = vmatpush1.msra.mxu0 0.0
        %752 = vmatprep.subr.mxu0 0.0
        %753 = vmatpush1.msra.mxu0 0.0
        %754 = vmatprep.subr.mxu0 0.0
        %755 = vmatpush1.msra.mxu0 0.0
        %756 = vmatprep.subr.mxu0 0.0
        %757 = vmatpush1.msra.mxu0 0.0
        %v758 = vand.u32 %v526, 4294901760
        %v759 = vsub.f32 %v526, %v758
        %760 = vmatprep.subr.mxu0 %v759
        %v761 = vand.u32 %v523, 4294901760
        %v762 = vsub.f32 %v523, %v761
        %763 = vmatpush1.msra.mxu0 %v762
        %v764 = vand.u32 %v508, 4294901760
        %v765 = vsub.f32 %v508, %v764
        %766 = vmatprep.subr.mxu0 %v765
        %v767 = vand.u32 %v507, 4294901760
        %v768 = vsub.f32 %v507, %v767
        %769 = vmatpush1.msra.mxu0 %v768
        %v770 = vand.u32 %v506, 4294901760
        %v771 = vsub.f32 %v506, %v770
        %772 = vmatprep.subr.mxu0 %v771
        %v773 = vand.u32 %v505, 4294901760
        %v774 = vsub.f32 %v505, %v773
        %775 = vmatpush1.msra.mxu0 %v774
        %v776 = vand.u32 %v504, 4294901760
        %v777 = vsub.f32 %v504, %v776
        %778 = vmatprep.subr.mxu0 %v777
        %v779 = vand.u32 %v503, 4294901760
        %v780 = vsub.f32 %v503, %v779
        %781 = vmatpush1.msra.mxu0 %v780
        %v782 = vand.u32 %v502, 4294901760
        %v783 = vsub.f32 %v502, %v782
        %784 = vmatprep.subr.mxu0 %v783
        %v785 = vand.u32 %v501, 4294901760
        %v786 = vsub.f32 %v501, %v785
        %787 = vmatpush1.msra.mxu0 %v786
        %788 = vmatprep.subr.mxu0 0.0
        %789 = vmatpush2.msra.mxu0 0.0
        %790 = vmatprep.subr.mxu0 0.0
        %791 = vmatpush2.msra.mxu0 0.0
        %792 = vmatprep.subr.mxu0 0.0
        %793 = vmatpush2.msra.mxu0 0.0
        %794 = vmatprep.subr.mxu0 0.0
        %795 = vmatpush2.msra.mxu0 0.0
        %796 = vmatprep.subr.mxu0 0.0
        %797 = vmatpush2.msra.mxu0 0.0
        %798 = vmatprep.subr.mxu0 0.0
        %799 = vmatpush2.msra.mxu0 0.0
        %800 = vmatprep.subr.mxu0 0.0
        %801 = vmatpush2.msra.mxu0 0.0
        %802 = vmatprep.subr.mxu0 0.0
        %803 = vmatpush2.msra.mxu0 0.0
        %804 = vmatprep.subr.mxu0 0.0
        %805 = vmatpush2.msra.mxu0 0.0
        %806 = vmatprep.subr.mxu0 0.0
        %807 = vmatpush2.msra.mxu0 0.0
        %808 = vmatprep.subr.mxu0 0.0
        %809 = vmatpush2.msra.mxu0 0.0
        %810 = vmatprep.subr.mxu0 0.0
        %811 = vmatpush2.msra.mxu0 0.0
        %812 = vmatprep.subr.mxu0 0.0
        %813 = vmatpush2.msra.mxu0 0.0
        %814 = vmatprep.subr.mxu0 0.0
        %815 = vmatpush2.msra.mxu0 0.0
        %816 = vmatprep.subr.mxu0 0.0
        %817 = vmatpush2.msra.mxu0 0.0
        %818 = vmatprep.subr.mxu0 0.0
        %819 = vmatpush2.msra.mxu0 0.0
        %820 = vmatprep.mubr.f32.mxu0 0.0
        %v821 = vand.u32 %v519, 4294901760
        %v822 = vsub.f32 %v519, %v821
        %823 = vmatmul.mubr.f32.gmra.mxu0 %v822
        %v824 = vpop.f32.mrf.mxu0
        %v825 = vadd.f32 %v732, %v824
        %v826 = vpop.f32.mrf.mxu0
        %v827 = vadd.f32 %v734, %v826
        %828 = vdwg.mxu0
        %829 = vmatprep.subr.mxu0 0.0
        %830 = vmatpush1.msra.mxu0 0.0
        %831 = vmatprep.subr.mxu0 0.0
        %832 = vmatpush1.msra.mxu0 0.0
        %833 = vmatprep.subr.mxu0 0.0
        %834 = vmatpush1.msra.mxu0 0.0
        %835 = vmatprep.subr.mxu0 0.0
        %836 = vmatpush1.msra.mxu0 0.0
        %837 = vmatprep.subr.mxu0 0.0
        %838 = vmatpush1.msra.mxu0 0.0
        %839 = vmatprep.subr.mxu0 0.0
        %840 = vmatpush1.msra.mxu0 0.0
        %841 = vmatprep.subr.mxu0 0.0
        %842 = vmatpush1.msra.mxu0 0.0
        %843 = vmatprep.subr.mxu0 0.0
        %844 = vmatpush1.msra.mxu0 0.0
        %845 = vmatprep.subr.mxu0 0.0
        %846 = vmatpush1.msra.mxu0 0.0
        %847 = vmatprep.subr.mxu0 0.0
        %848 = vmatpush1.msra.mxu0 0.0
        %849 = vmatprep.subr.mxu0 0.0
        %850 = vmatpush1.msra.mxu0 0.0
        %v851 = vand.u32 %v526, 4294901760
        %852 = vmatprep.subr.mxu0 %v851
        %v853 = vand.u32 %v523, 4294901760
        %854 = vmatpush1.msra.mxu0 %v853
        %v855 = vand.u32 %v508, 4294901760
        %856 = vmatprep.subr.mxu0 %v855
        %v857 = vand.u32 %v507, 4294901760
        %858 = vmatpush1.msra.mxu0 %v857
        %v859 = vand.u32 %v506, 4294901760
        %860 = vmatprep.subr.mxu0 %v859
        %v861 = vand.u32 %v505, 4294901760
        %862 = vmatpush1.msra.mxu0 %v861
        %v863 = vand.u32 %v504, 4294901760
        %864 = vmatprep.subr.mxu0 %v863
        %v865 = vand.u32 %v503, 4294901760
        %866 = vmatpush1.msra.mxu0 %v865
        %v867 = vand.u32 %v502, 4294901760
        %868 = vmatprep.subr.mxu0 %v867
        %v869 = vand.u32 %v501, 4294901760
        %870 = vmatpush1.msra.mxu0 %v869
        %871 = vmatprep.subr.mxu0 0.0
        %872 = vmatpush2.msra.mxu0 0.0
        %873 = vmatprep.subr.mxu0 0.0
        %874 = vmatpush2.msra.mxu0 0.0
        %875 = vmatprep.subr.mxu0 0.0
        %876 = vmatpush2.msra.mxu0 0.0
        %877 = vmatprep.subr.mxu0 0.0
        %878 = vmatpush2.msra.mxu0 0.0
        %879 = vmatprep.subr.mxu0 0.0
        %880 = vmatpush2.msra.mxu0 0.0
        %881 = vmatprep.subr.mxu0 0.0
        %882 = vmatpush2.msra.mxu0 0.0
        %883 = vmatprep.subr.mxu0 0.0
        %884 = vmatpush2.msra.mxu0 0.0
        %885 = vmatprep.subr.mxu0 0.0
        %886 = vmatpush2.msra.mxu0 0.0
        %887 = vmatprep.subr.mxu0 0.0
        %888 = vmatpush2.msra.mxu0 0.0
        %889 = vmatprep.subr.mxu0 0.0
        %890 = vmatpush2.msra.mxu0 0.0
        %891 = vmatprep.subr.mxu0 0.0
        %892 = vmatpush2.msra.mxu0 0.0
        %893 = vmatprep.subr.mxu0 0.0
        %894 = vmatpush2.msra.mxu0 0.0
        %895 = vmatprep.subr.mxu0 0.0
        %896 = vmatpush2.msra.mxu0 0.0
        %897 = vmatprep.subr.mxu0 0.0
        %898 = vmatpush2.msra.mxu0 0.0
        %899 = vmatprep.subr.mxu0 0.0
        %900 = vmatpush2.msra.mxu0 0.0
        %901 = vmatprep.subr.mxu0 0.0
        %902 = vmatpush2.msra.mxu0 0.0
        %903 = vmatprep.mubr.f32.mxu0 0.0
        %v904 = vand.u32 %v519, 4294901760
        %v905 = vsub.f32 %v519, %v904
        %v906 = vand.u32 %v905, 4294901760
        %907 = vmatmul.mubr.f32.gmra.mxu0 %v906
        %v908 = vpop.f32.mrf.mxu0
        %v909 = vadd.f32 %v825, %v908
        %v910 = vpop.f32.mrf.mxu0
        %v911 = vadd.f32 %v827, %v910
        %912 = vdwg.mxu0
        %913 = vmatprep.subr.mxu0 0.0
        %914 = vmatpush1.msra.mxu0 0.0
        %915 = vmatprep.subr.mxu0 0.0
        %916 = vmatpush1.msra.mxu0 0.0
        %917 = vmatprep.subr.mxu0 0.0
        %918 = vmatpush1.msra.mxu0 0.0
        %919 = vmatprep.subr.mxu0 0.0
        %920 = vmatpush1.msra.mxu0 0.0
        %921 = vmatprep.subr.mxu0 0.0
        %922 = vmatpush1.msra.mxu0 0.0
        %923 = vmatprep.subr.mxu0 0.0
        %924 = vmatpush1.msra.mxu0 0.0
        %925 = vmatprep.subr.mxu0 0.0
        %926 = vmatpush1.msra.mxu0 0.0
        %927 = vmatprep.subr.mxu0 0.0
        %928 = vmatpush1.msra.mxu0 0.0
        %929 = vmatprep.subr.mxu0 0.0
        %930 = vmatpush1.msra.mxu0 0.0
        %931 = vmatprep.subr.mxu0 0.0
        %932 = vmatpush1.msra.mxu0 0.0
        %933 = vmatprep.subr.mxu0 0.0
        %934 = vmatpush1.msra.mxu0 0.0
        %v935 = vand.u32 %v526, 4294901760
        %v936 = vsub.f32 %v526, %v935
        %v937 = vand.u32 %v936, 4294901760
        %938 = vmatprep.subr.mxu0 %v937
        %v939 = vand.u32 %v523, 4294901760
        %v940 = vsub.f32 %v523, %v939
        %v941 = vand.u32 %v940, 4294901760
        %942 = vmatpush1.msra.mxu0 %v941
        %v943 = vand.u32 %v508, 4294901760
        %v944 = vsub.f32 %v508, %v943
        %v945 = vand.u32 %v944, 4294901760
        %946 = vmatprep.subr.mxu0 %v945
        %v947 = vand.u32 %v507, 4294901760
        %v948 = vsub.f32 %v507, %v947
        %v949 = vand.u32 %v948, 4294901760
        %950 = vmatpush1.msra.mxu0 %v949
        %v951 = vand.u32 %v506, 4294901760
        %v952 = vsub.f32 %v506, %v951
        %v953 = vand.u32 %v952, 4294901760
        %954 = vmatprep.subr.mxu0 %v953
        %v955 = vand.u32 %v505, 4294901760
        %v956 = vsub.f32 %v505, %v955
        %v957 = vand.u32 %v956, 4294901760
        %958 = vmatpush1.msra.mxu0 %v957
        %v959 = vand.u32 %v504, 4294901760
        %v960 = vsub.f32 %v504, %v959
        %v961 = vand.u32 %v960, 4294901760
        %962 = vmatprep.subr.mxu0 %v961
        %v963 = vand.u32 %v503, 4294901760
        %v964 = vsub.f32 %v503, %v963
        %v965 = vand.u32 %v964, 4294901760
        %966 = vmatpush1.msra.mxu0 %v965
        %v967 = vand.u32 %v502, 4294901760
        %v968 = vsub.f32 %v502, %v967
        %v969 = vand.u32 %v968, 4294901760
        %970 = vmatprep.subr.mxu0 %v969
        %v971 = vand.u32 %v501, 4294901760
        %v972 = vsub.f32 %v501, %v971
        %v973 = vand.u32 %v972, 4294901760
        %974 = vmatpush1.msra.mxu0 %v973
        %975 = vmatprep.subr.mxu0 0.0
        %976 = vmatpush2.msra.mxu0 0.0
        %977 = vmatprep.subr.mxu0 0.0
        %978 = vmatpush2.msra.mxu0 0.0
        %979 = vmatprep.subr.mxu0 0.0
        %980 = vmatpush2.msra.mxu0 0.0
        %981 = vmatprep.subr.mxu0 0.0
        %982 = vmatpush2.msra.mxu0 0.0
        %983 = vmatprep.subr.mxu0 0.0
        %984 = vmatpush2.msra.mxu0 0.0
        %985 = vmatprep.subr.mxu0 0.0
        %986 = vmatpush2.msra.mxu0 0.0
        %987 = vmatprep.subr.mxu0 0.0
        %988 = vmatpush2.msra.mxu0 0.0
        %989 = vmatprep.subr.mxu0 0.0
        %990 = vmatpush2.msra.mxu0 0.0
        %991 = vmatprep.subr.mxu0 0.0
        %992 = vmatpush2.msra.mxu0 0.0
        %993 = vmatprep.subr.mxu0 0.0
        %994 = vmatpush2.msra.mxu0 0.0
        %995 = vmatprep.subr.mxu0 0.0
        %996 = vmatpush2.msra.mxu0 0.0
        %997 = vmatprep.subr.mxu0 0.0
        %998 = vmatpush2.msra.mxu0 0.0
        %999 = vmatprep.subr.mxu0 0.0
        %1000 = vmatpush2.msra.mxu0 0.0
        %1001 = vmatprep.subr.mxu0 0.0
        %1002 = vmatpush2.msra.mxu0 0.0
        %1003 = vmatprep.subr.mxu0 0.0
        %1004 = vmatpush2.msra.mxu0 0.0
        %1005 = vmatprep.subr.mxu0 0.0
        %1006 = vmatpush2.msra.mxu0 0.0
        %1007 = vmatprep.mubr.f32.mxu0 0.0
        %v1008 = vand.u32 %v519, 4294901760
        %1009 = vmatmul.mubr.f32.gmra.mxu0 %v1008
        %v1010 = vpop.f32.mrf.mxu0
        %v1011 = vadd.f32 %v909, %v1010
        %v1012 = vpop.f32.mrf.mxu0
        %v1013 = vadd.f32 %v911, %v1012
        %1014 = vdwg.mxu0
        %1015 = vmatprep.subr.mxu0 0.0
        %1016 = vmatpush1.msra.mxu0 0.0
        %1017 = vmatprep.subr.mxu0 0.0
        %1018 = vmatpush1.msra.mxu0 0.0
        %1019 = vmatprep.subr.mxu0 0.0
        %1020 = vmatpush1.msra.mxu0 0.0
        %1021 = vmatprep.subr.mxu0 0.0
        %1022 = vmatpush1.msra.mxu0 0.0
        %1023 = vmatprep.subr.mxu0 0.0
        %1024 = vmatpush1.msra.mxu0 0.0
        %1025 = vmatprep.subr.mxu0 0.0
        %1026 = vmatpush1.msra.mxu0 0.0
        %1027 = vmatprep.subr.mxu0 0.0
        %1028 = vmatpush1.msra.mxu0 0.0
        %1029 = vmatprep.subr.mxu0 0.0
        %1030 = vmatpush1.msra.mxu0 0.0
        %1031 = vmatprep.subr.mxu0 0.0
        %1032 = vmatpush1.msra.mxu0 0.0
        %1033 = vmatprep.subr.mxu0 0.0
        %1034 = vmatpush1.msra.mxu0 0.0
        %1035 = vmatprep.subr.mxu0 0.0
        %1036 = vmatpush1.msra.mxu0 0.0
        %v1037 = vand.u32 %v526, 4294901760
        %1038 = vmatprep.subr.mxu0 %v1037
        %v1039 = vand.u32 %v523, 4294901760
        %1040 = vmatpush1.msra.mxu0 %v1039
        %v1041 = vand.u32 %v508, 4294901760
        %1042 = vmatprep.subr.mxu0 %v1041
        %v1043 = vand.u32 %v507, 4294901760
        %1044 = vmatpush1.msra.mxu0 %v1043
        %v1045 = vand.u32 %v506, 4294901760
        %1046 = vmatprep.subr.mxu0 %v1045
        %v1047 = vand.u32 %v505, 4294901760
        %1048 = vmatpush1.msra.mxu0 %v1047
        %v1049 = vand.u32 %v504, 4294901760
        %1050 = vmatprep.subr.mxu0 %v1049
        %v1051 = vand.u32 %v503, 4294901760
        %1052 = vmatpush1.msra.mxu0 %v1051
        %v1053 = vand.u32 %v502, 4294901760
        %1054 = vmatprep.subr.mxu0 %v1053
        %v1055 = vand.u32 %v501, 4294901760
        %1056 = vmatpush1.msra.mxu0 %v1055
        %1057 = vmatprep.subr.mxu0 0.0
        %1058 = vmatpush2.msra.mxu0 0.0
        %1059 = vmatprep.subr.mxu0 0.0
        %1060 = vmatpush2.msra.mxu0 0.0
        %1061 = vmatprep.subr.mxu0 0.0
        %1062 = vmatpush2.msra.mxu0 0.0
        %1063 = vmatprep.subr.mxu0 0.0
        %1064 = vmatpush2.msra.mxu0 0.0
        %1065 = vmatprep.subr.mxu0 0.0
        %1066 = vmatpush2.msra.mxu0 0.0
        %1067 = vmatprep.subr.mxu0 0.0
        %1068 = vmatpush2.msra.mxu0 0.0
        %1069 = vmatprep.subr.mxu0 0.0
        %1070 = vmatpush2.msra.mxu0 0.0
        %1071 = vmatprep.subr.mxu0 0.0
        %1072 = vmatpush2.msra.mxu0 0.0
        %1073 = vmatprep.subr.mxu0 0.0
        %1074 = vmatpush2.msra.mxu0 0.0
        %1075 = vmatprep.subr.mxu0 0.0
        %1076 = vmatpush2.msra.mxu0 0.0
        %1077 = vmatprep.subr.mxu0 0.0
        %1078 = vmatpush2.msra.mxu0 0.0
        %1079 = vmatprep.subr.mxu0 0.0
        %1080 = vmatpush2.msra.mxu0 0.0
        %1081 = vmatprep.subr.mxu0 0.0
        %1082 = vmatpush2.msra.mxu0 0.0
        %1083 = vmatprep.subr.mxu0 0.0
        %1084 = vmatpush2.msra.mxu0 0.0
        %1085 = vmatprep.subr.mxu0 0.0
        %1086 = vmatpush2.msra.mxu0 0.0
        %1087 = vmatprep.subr.mxu0 0.0
        %1088 = vmatpush2.msra.mxu0 0.0
        %1089 = vmatprep.mubr.f32.mxu0 0.0
        %v1090 = vand.u32 %v519, 4294901760
        %1091 = vmatmul.mubr.f32.gmra.mxu0 %v1090
        %v1092 = vpop.f32.mrf.mxu0
        %v1093 = vadd.f32 %v1011, %v1092
        %v1094 = vpop.f32.mrf.mxu0
        %v1095 = vadd.f32 %v1013, %v1094
        %1096 = vdwg.mxu0
        %v1097 = vxor.u32 %v1093, 2147483648
        %v1098 = vxor.u32 %v1095, 2147483648
        %v1099 = vmul.f32 %v1097, 1.442695
        %v1100 = vpow.pop %v1099
        %v1101 = vmul.f32 %v1098, 1.442695
        %v1102 = vpow.pop %v1101
        %v1103 = vadd.f32 %v1100, 1.0
        %v1104 = vadd.f32 %v1102, 1.0
        %v1105 = vrcp.pop %v1103
        %v1106 = vmul.f32 1.0, %v1105
        %v1107 = vrcp.pop %v1104
        %v1108 = vmul.f32 1.0, %v1107
        %v1109 = vmul.f32 %v1093, %v1106
        %v1110 = vmul.f32 %v1095, %v1108
        %1111 = vst [vmem:[%s268] sm:$0xff] %v1109
        %1112 = vst [vmem:[%s268 + $0x8] sm:$0xff] %v1110
        %s1113 = sand.u32 %s143, 1
        %s1114 = scalar_lea.sflag [#allocation5], %s1113
        %s1115 = sand.u32 %s143, 1
        %s1116 = smul.addr %s1115, 16
        %s1117 = scalar_lea.vmem [#allocation8], %s1116
        // Predicated region
        $region45: #{tpu_custom_call.1} parent=35 // pred_check
          %p1118 = pneg %p153
        $region46: #{tpu_custom_call.1} parent=35 // pred_check_branch
          %1120 = sbr.rel (%p1118) target = $region48
        $region47: #{tpu_custom_call.1} parent=35 // pred_region
          %s1122 = ssub.s32 256, 256
          %1123 = vsyncadd %s1114, %s1122
          %s1124 = smul.addr %s27, 2
          %s1125 = smul.addr %s26, 2
          %s1126 = sadd.s32 %s1124, %s1125
          %s1127 = smul.addr %s1126, 128
          %s1128 = scalar_lea.hbm %s4, %s1127
          %s1130 = sshll.u32 %s1117, 4
          %s1131 = int_to_ptr.vmem [resolvable:$true] %s1130
          %1133 = dma.vmem_to_hbm [thread:$0]  %s1131, 256, %s1128, %s1114
        $region48: #{tpu_custom_call.1} parent=35 // pred_fallthru
          _
      $region36: #{tpu_custom_call.1} parent=5 // pred_fallthru
        _
      %p1134 = scmp.le.s32.totalorder 2, %s17
      // Predicated region
      $region49: #{tpu_custom_call.1} parent=5 // pred_check
        %p1135 = pneg %p1134
      $region50: #{tpu_custom_call.1} parent=5 // pred_check_branch
        %1137 = sbr.rel (%p1135) target = $region52
      $region51: #{tpu_custom_call.1} parent=5 // pred_region
        %s1138 = ssub.s32 %s17, 2
        // Predicated region
        $region53: #{tpu_custom_call.1} parent=51 // pred_check
          %p1139 = pneg %p159
        $region54: #{tpu_custom_call.1} parent=51 // pred_check_branch
          %1141 = sbr.rel (%p1139) target = $region56
        $region55: #{tpu_custom_call.1} parent=51 // pred_region
          %s1142 = sand.u32 %s144, 1
          %s1143 = scalar_lea.sflag [#allocation5], %s1142
          %s1144 = sand.u32 %s144, 1
          %s1145 = smul.addr %s1144, 16
          %s1146 = scalar_lea.vmem [#allocation8], %s1145
          %1147 = dma.done %s1143, 256
        $region56: #{tpu_custom_call.1} parent=51 // pred_fallthru
          _
      $region52: #{tpu_custom_call.1} parent=5 // pred_fallthru
        _
    $region6: #{tpu_custom_call.1} parent=1 // loop_footer
      %s21 = sadd.s32 1, %s17
    $region7: #{tpu_custom_call.1} parent=1 // loop_footer_branch
      %16 = sbr.rel target = $region3
    $region8: #{tpu_custom_call.1} parent=1 // loop_exit
      _
    %1148 = vsyncpa [#allocation4], 1
    %s1149 = scalar_lea.sflag [#allocation4], 1
    %1150 = vsyncpa %s1149, 1
    %1151 = vsyncpa [#allocation7], 1
    %1152 = vsyncpa [#allocation5], 1
    %s1153 = scalar_lea.sflag [#allocation5], 1
    %1154 = vsyncpa %s1153, 1

</llo_original>
